<compile_context>
chip_gen: v7x
topology: tpu7x:2x2x1
jax: 0.10.0
libtpu: 0.0.40
codegen_flags: <defaults>
</compile_context>

<pallas_src>
import jax
import jax.numpy as jnp
from jax.experimental import pallas as pl
from jax.experimental.pallas import tpu as pltpu


def _make_attention_kernel(heads, dim_head, scale, n, c):
    hidden = heads * dim_head

    def attn_kernel(x_ref, wqkv_ref, wout_ref, bias_ref, o_ref):
        # x_ref:    (1, C, N)        -- input feature map for this batch element
        # wqkv_ref: (3*hidden, C)    -- to_qkv 1x1-conv weight (all heads, fused)
        # wout_ref: (C, hidden)      -- to_out 1x1-conv weight
        # bias_ref: (C, 1)           -- to_out bias
        # o_ref:    (1, C, N)        -- output feature map
        x = x_ref[0]                                                      # (C, N)

        # Fused QKV projection for ALL heads in one MXU contraction.
        qkv = jnp.dot(wqkv_ref[...], x,
                      preferred_element_type=jnp.float32)                # (3*hidden, N)

        q = qkv[0 * hidden:1 * hidden].reshape(heads, dim_head, n) * scale
        k = qkv[1 * hidden:2 * hidden].reshape(heads, dim_head, n)
        v = qkv[2 * hidden:3 * hidden].reshape(heads, dim_head, n)

        # sim[h, i, j] = sum_d q[h, d, i] * k[h, d, j]
        # Batched over heads; no explicit transpose is materialized.
        sim = jnp.einsum("hdi,hdj->hij", q, k,
                         preferred_element_type=jnp.float32)             # (h, N, N)
        sim = sim - jnp.max(sim, axis=-1, keepdims=True)
        e = jnp.exp(sim)
        denom = jnp.sum(e, axis=-1, keepdims=True)
        attn = e * pl.reciprocal(denom, approx=True)                     # EUP reciprocal

        # out[h, d, i] = sum_j v[h, d, j] * attn[h, i, j]
        # (operand order chosen so dot_general's natural output is (h, d, i)).
        out = jnp.einsum("hdj,hij->hdi", v, attn,
                         preferred_element_type=jnp.float32)             # (h, dh, N)
        out_flat = out.reshape(hidden, n)                                # (hidden, N)

        # Single fused output projection across all heads + bias.
        o_ref[0] = (jnp.dot(wout_ref[...], out_flat,
                            preferred_element_type=jnp.float32)
                    + bias_ref[...])                                     # (C, N)

    return attn_kernel


def attention_forward(x_nchw, params, heads, dim_head):
    """x_nchw: (B, C, H, W) float32. Returns (B, C, H, W)."""
    B, C, H, W = x_nchw.shape
    N = H * W
    hidden = heads * dim_head
    scale = dim_head ** (-0.5)

    # NCHW -> (B, C, N): pure reshape, no transpose, N stays lane-dense.
    x_seq = x_nchw.reshape(B, C, N)

    w_qkv = params["w_qkv"]                    # (3*hidden, C)   (1x1 conv, squeezed)
    w_out = params["w_out"]                    # (C, hidden)
    b_out = params["b_out"].reshape(C, 1)      # (C, 1)

    kernel = _make_attention_kernel(heads, dim_head, scale, N, C)

    out_seq = pl.pallas_call(
        kernel,
        out_shape=jax.ShapeDtypeStruct((B, C, N), jnp.float32),
        grid_spec=pltpu.PrefetchScalarGridSpec(
            num_scalar_prefetch=0,
            grid=(B,),
            in_specs=[
                pl.BlockSpec((1, C, N), lambda b: (b, 0, 0)),            # x (per batch)
                pl.BlockSpec((3 * hidden, C), lambda b: (0, 0)),         # w_qkv (resident)
                pl.BlockSpec((C, hidden), lambda b: (0, 0)),             # w_out (resident)
                pl.BlockSpec((C, 1), lambda b: (0, 0)),                  # bias  (resident)
            ],
            out_specs=pl.BlockSpec((1, C, N), lambda b: (b, 0, 0)),
        ),
        compiler_params=pltpu.CompilerParams(
            dimension_semantics=("parallel",),        # batch axis -> megacore-shardable
            vmem_limit_bytes=64 * 1024 * 1024,
        ),
    )(x_seq, w_qkv, w_out, b_out)

    # (B, C, N) -> NCHW: pure reshape.
    return out_seq.reshape(B, C, H, W)


def attention_reference(x_nchw, params, heads, dim_head):
    """Pure-JAX reference mirroring the PyTorch forward exactly."""
    B, C, H, W = x_nchw.shape
    N = H * W
    scale = dim_head ** (-0.5)

    w_qkv = params["w_qkv"]
    w_out = params["w_out"]
    b_out = params["b_out"]

    x_flat = x_nchw.reshape(B, C, N)                               # (B, C, N)
    qkv = jnp.einsum("oc,bcn->bon", w_qkv, x_flat)                 # (B, 3*hidden, N)
    q, k, v = jnp.split(qkv, 3, axis=1)                            # each (B, hidden, N)

    def to_heads(t):
        return t.reshape(B, heads, dim_head, N)                    # b h d n

    q, k, v = map(to_heads, (q, k, v))
    q = q * scale
    sim = jnp.einsum("bhdi,bhdj->bhij", q, k)
    sim = sim - jnp.max(sim, axis=-1, keepdims=True)
    attn = jax.nn.softmax(sim, axis=-1)
    out = jnp.einsum("bhij,bhdj->bhid", attn, v)                   # (B, h, N, d)
    out = jnp.transpose(out, (0, 1, 3, 2)).reshape(B, heads * dim_head, N)
    y = jnp.einsum("oc,bcn->bon", w_out, out) + b_out[None, :, None]
    return y.reshape(B, C, H, W)


if __name__ == "__main__":
    # Small shapes consistent with the module (Unet mid attention).
    B, C, H, W = 2, 16, 8, 8
    heads, dim_head = 2, 8
    hidden = heads * dim_head

    key = jax.random.PRNGKey(0)
    kx, k1, k2, k3 = jax.random.split(key, 4)

    x = jax.random.normal(kx, (B, C, H, W), dtype=jnp.float32)

    # Deterministic parameters (1x1 conv weights with spatial dims squeezed).
    params = {
        "w_qkv": 0.1 * jax.random.normal(k1, (3 * hidden, C), dtype=jnp.float32),
        "w_out": 0.1 * jax.random.normal(k2, (C, hidden), dtype=jnp.float32),
        "b_out": 0.1 * jax.random.normal(k3, (C,), dtype=jnp.float32),
    }

    y = attention_forward(x, params, heads, dim_head)
    y = jax.block_until_ready(y)

    y_ref = attention_reference(x, params, heads, dim_head)
    assert y.shape == (B, C, H, W)
    # Tolerance accounts for the EUP approximate reciprocal in the softmax denom.
    assert jnp.allclose(y, y_ref, rtol=2e-3, atol=2e-3), "mismatch vs reference"

    print("KERNEL_OK")
</pallas_src>

<mosaic_0001>
module attributes {stable_mosaic.version = 11 : i64} {
  func.func @attn_kernel(%arg0: i32, %arg1: memref<1x16x64xf32, #tpu.memory_space<vmem>>, %arg2: memref<48x16xf32, #tpu.memory_space<vmem>>, %arg3: memref<16x16xf32, #tpu.memory_space<vmem>>, %arg4: memref<16x1xf32, #tpu.memory_space<vmem>>, %arg5: memref<1x16x64xf32, #tpu.memory_space<vmem>>) attributes {dimension_semantics = [#tpu.dimension_semantics<parallel>], iteration_bounds = array<i64: 2>, scalar_prefetch = 0 : i64, scratch_operands = 0 : i64, tpu.core_type = #tpu.core_type<tc>, window_params = [{transform_indices = @transform_0, window_bounds = array<i64: 1, 16, 64>}, {pipeline_mode = #tpu.pipeline_mode<synchronous>, transform_indices = @transform_1, window_bounds = array<i64: 48, 16>}, {pipeline_mode = #tpu.pipeline_mode<synchronous>, transform_indices = @transform_2, window_bounds = array<i64: 16, 16>}, {pipeline_mode = #tpu.pipeline_mode<synchronous>, transform_indices = @transform_3, window_bounds = array<i64: 16, 1>}, {transform_indices = @transform_4, window_bounds = array<i64: 1, 16, 64>}]} {
    %c0 = arith.constant 0 : index
    %c0_0 = arith.constant 0 : index
    %c0_1 = arith.constant 0 : index
    %0 = vector.load %arg1[%c0, %c0_0, %c0_1] : memref<1x16x64xf32, #tpu.memory_space<vmem>>, vector<1x16x64xf32>
    %1 = vector.shape_cast %0 : vector<1x16x64xf32> to vector<16x64xf32>
    %c0_2 = arith.constant 0 : index
    %c0_3 = arith.constant 0 : index
    %2 = vector.load %arg2[%c0_2, %c0_3] : memref<48x16xf32, #tpu.memory_space<vmem>>, vector<48x16xf32>
    %cst = arith.constant dense<0.000000e+00> : vector<48x64xf32>
    %3 = tpu.matmul %2, %1, %cst {dimension_numbers = #tpu.dot_dimension_numbers<[1], [0], [0], [1], [0, 0, 1, 1], [], []>} : vector<48x16xf32>, vector<16x64xf32>, vector<48x64xf32> -> vector<48x64xf32>
    %4 = vector.extract_strided_slice %3 {offsets = [0, 0], sizes = [16, 64], strides = [1, 1]} : vector<48x64xf32> to vector<16x64xf32>
    %5 = vector.shape_cast %4 : vector<16x64xf32> to vector<2x8x64xf32>
    %cst_4 = arith.constant 0.353553385 : f32
    %6 = vector.broadcast %cst_4 : f32 to vector<2x8x64xf32>
    %7 = arith.mulf %5, %6 : vector<2x8x64xf32>
    %8 = vector.extract_strided_slice %3 {offsets = [16, 0], sizes = [16, 64], strides = [1, 1]} : vector<48x64xf32> to vector<16x64xf32>
    %9 = vector.shape_cast %8 : vector<16x64xf32> to vector<2x8x64xf32>
    %10 = vector.extract_strided_slice %3 {offsets = [32, 0], sizes = [16, 64], strides = [1, 1]} : vector<48x64xf32> to vector<16x64xf32>
    %11 = vector.shape_cast %10 : vector<16x64xf32> to vector<2x8x64xf32>
    "tpu.trace_start"() <{level = 10 : i32, message = "hdi,hdj->hij"}> : () -> ()
    %cst_5 = arith.constant dense<0.000000e+00> : vector<2x64x64xf32>
    %12 = tpu.matmul %7, %9, %cst_5 {dimension_numbers = #tpu.dot_dimension_numbers<[1], [1], [2], [2], [0, 0, 0, 2, 1, 2], [0], [0]>} : vector<2x8x64xf32>, vector<2x8x64xf32>, vector<2x64x64xf32> -> vector<2x64x64xf32>
    "tpu.trace_stop"() : () -> ()
    %cst_6 = arith.constant dense<0xFF800000> : vector<2x64xf32>
    %13 = vector.multi_reduction <maximumf>, %12, %cst_6 [2] : vector<2x64x64xf32> to vector<2x64xf32>
    %14 = vector.shape_cast %13 : vector<2x64xf32> to vector<2x64x1xf32>
    %15 = vector.broadcast %14 : vector<2x64x1xf32> to vector<2x64x64xf32>
    %16 = arith.subf %12, %15 : vector<2x64x64xf32>
    %17 = math.exp %16 : vector<2x64x64xf32>
    %cst_7 = arith.constant dense<0.000000e+00> : vector<2x64xf32>
    %18 = vector.multi_reduction <add>, %17, %cst_7 [2] : vector<2x64x64xf32> to vector<2x64xf32>
    %19 = vector.shape_cast %18 : vector<2x64xf32> to vector<2x64x1xf32>
    %20 = tpu.reciprocal %19 {approx = true} : vector<2x64x1xf32> -> vector<2x64x1xf32>
    %21 = vector.broadcast %20 : vector<2x64x1xf32> to vector<2x64x64xf32>
    %22 = arith.mulf %17, %21 : vector<2x64x64xf32>
    "tpu.trace_start"() <{level = 10 : i32, message = "hdj,hij->hdi"}> : () -> ()
    %cst_8 = arith.constant dense<0.000000e+00> : vector<2x8x64xf32>
    %23 = tpu.matmul %11, %22, %cst_8 {dimension_numbers = #tpu.dot_dimension_numbers<[2], [2], [1], [1], [0, 0, 0, 1, 1, 1], [0], [0]>} : vector<2x8x64xf32>, vector<2x64x64xf32>, vector<2x8x64xf32> -> vector<2x8x64xf32>
    "tpu.trace_stop"() : () -> ()
    %24 = vector.shape_cast %23 : vector<2x8x64xf32> to vector<16x64xf32>
    %c0_9 = arith.constant 0 : index
    %c0_10 = arith.constant 0 : index
    %25 = vector.load %arg3[%c0_9, %c0_10] : memref<16x16xf32, #tpu.memory_space<vmem>>, vector<16x16xf32>
    %cst_11 = arith.constant dense<0.000000e+00> : vector<16x64xf32>
    %26 = tpu.matmul %25, %24, %cst_11 {dimension_numbers = #tpu.dot_dimension_numbers<[1], [0], [0], [1], [0, 0, 1, 1], [], []>} : vector<16x16xf32>, vector<16x64xf32>, vector<16x64xf32> -> vector<16x64xf32>
    %c0_12 = arith.constant 0 : index
    %c0_13 = arith.constant 0 : index
    %27 = vector.load %arg4[%c0_12, %c0_13] : memref<16x1xf32, #tpu.memory_space<vmem>>, vector<16x1xf32>
    %28 = vector.broadcast %27 : vector<16x1xf32> to vector<16x64xf32>
    %29 = arith.addf %26, %28 : vector<16x64xf32>
    %c0_14 = arith.constant 0 : index
    %c0_15 = arith.constant 0 : index
    %c0_16 = arith.constant 0 : index
    %30 = vector.load %arg5[%c0_14, %c0_15, %c0_16] : memref<1x16x64xf32, #tpu.memory_space<vmem>>, vector<1x16x64xf32>
    %31 = vector.shape_cast %30 : vector<1x16x64xf32> to vector<16x64xf32>
    %32 = vector.shape_cast %29 : vector<16x64xf32> to vector<1x16x64xf32>
    tpu.vector_store %arg5[%c0_14, %c0_15, %c0_16], %32 {strides = array<i32>} : memref<1x16x64xf32, #tpu.memory_space<vmem>>, vector<1x16x64xf32>,
    return
  }
  func.func @transform_0(%arg0: i32) -> (i32, i32, i32) {
    %c0_i32 = arith.constant 0 : i32
    %c0_i32_0 = arith.constant 0 : i32
    %c0_i32_1 = arith.constant 0 : i32
    return %arg0, %c0_i32, %c0_i32_0 : i32, i32, i32
  }
  func.func @transform_1(%arg0: i32) -> (i32, i32) {
    %c0_i32 = arith.constant 0 : i32
    %c0_i32_0 = arith.constant 0 : i32
    %c0_i32_1 = arith.constant 0 : i32
    return %c0_i32, %c0_i32_0 : i32, i32
  }
  func.func @transform_2(%arg0: i32) -> (i32, i32) {
    %c0_i32 = arith.constant 0 : i32
    %c0_i32_0 = arith.constant 0 : i32
    %c0_i32_1 = arith.constant 0 : i32
    return %c0_i32, %c0_i32_0 : i32, i32
  }
  func.func @transform_3(%arg0: i32) -> (i32, i32) {
    %c0_i32 = arith.constant 0 : i32
    %c0_i32_0 = arith.constant 0 : i32
    %c0_i32_1 = arith.constant 0 : i32
    return %c0_i32, %c0_i32_0 : i32, i32
  }
  func.func @transform_4(%arg0: i32) -> (i32, i32, i32) {
    %c0_i32 = arith.constant 0 : i32
    %c0_i32_0 = arith.constant 0 : i32
    %c0_i32_1 = arith.constant 0 : i32
    return %arg0, %c0_i32, %c0_i32_0 : i32, i32, i32
  }
}

</mosaic_0001>

<llo_original>
// kernel: tpu_custom_call.1
$region0: #{tpu_custom_call.1}
  #allocation0 [shape = 'u32[]', space=smem, size = 0x4, offset = 0x4, fixed_abs, tag = 'smem constant byte address 0x4 - core index']
  #allocation1 [shape = 'u32[144,128]{1,0:T(1,128)}', space=vmem, size = 0x12000, scoped, tag = 'internal scratch']
  %s0 = inlined_call_operand.hbm [shape: f32[2,16,64], index: 0, kind: input, shape index: {}]
  %s1 = inlined_call_operand.hbm [shape: f32[48,16], index: 1, kind: input, shape index: {}]
  %s2 = inlined_call_operand.hbm [shape: f32[16,16], index: 2, kind: input, shape index: {}]
  %s3 = inlined_call_operand.hbm [shape: f32[16,1], index: 3, kind: input, shape index: {}]
  %s4 = inlined_call_operand.hbm [shape: f32[2,16,64], index: 4, kind: output, shape index: {}]
  %s5 = sld [smem:[#allocation0]]
  $region65: #{tpu_custom_call.1} parent=0
    _
  %s7 = ssub.s32 1, %s5
  %s8 = scalar_select 0, %s7, %s5
  $region1: #{tpu_custom_call.1} parent=0
    #allocation2 [shape = 'u8[16384]{0}', space=vmem, size = 0x4000, scoped, tag = 'input window, operand 0']
    #allocation3 [shape = 's32[2]{0}', space=sflag, size = 0x8, scoped, tag = 'scoped memory for tpu_custom_call.1']
    #allocation4 [shape = 's32[2]{0}', space=sflag, size = 0x8, scoped, tag = 'scoped memory for tpu_custom_call.1']
    #allocation5 [shape = 'u8[24576]{0}', space=vmem, size = 0x6000, scoped, tag = 'input window, operand 1, single buffered']
    #allocation6 [shape = 's32[1]{0}', space=sflag, size = 0x4, scoped, tag = 'scoped memory for tpu_custom_call.1']
    #allocation7 [shape = 'u8[8192]{0}', space=vmem, size = 0x2000, scoped, tag = 'input window, operand 2, single buffered']
    #allocation8 [shape = 'u8[8192]{0}', space=vmem, size = 0x2000, scoped, tag = 'input window, operand 3, single buffered']
    #allocation9 [shape = 's32[1]{0}', space=sflag, size = 0x4, scoped, tag = 'scoped memory for tpu_custom_call.1']
    #allocation10 [shape = 'u8[16384]{0}', space=vmem, size = 0x4000, scoped, tag = 'output window, operand 0']
    %9 = vsyncpa [#allocation3], 0
    %s10 = scalar_lea.sflag [#allocation3], 1
    %11 = vsyncpa %s10, 0
    %12 = vsyncpa [#allocation6], 0
    %13 = vsyncpa [#allocation9], 0
    %14 = vsyncpa [#allocation4], 0
    %s15 = scalar_lea.sflag [#allocation4], 1
    %16 = vsyncpa %s15, 0
    loop: start=0, step=1, limit=4
    $region2: #{tpu_custom_call.1} parent=1 // loop_pre_header
      _
    $region3: #{tpu_custom_call.1} parent=1 // loop_header
      %s18 = sphi 0, %s22
      %p19 = scmp.ge.s32.totalorder %s18, 4
      %s28 = sphi 0, %s30
      %s31 = sphi 0, %s28
      %s32 = sphi 0, %s31
      %s48 = sphi 0, %s32
      %s52 = sphi 0, %s52
      %s54 = sphi 0, %s52
      %s55 = sphi 0, %s54
      %s69 = sphi 0, %s55
      %s73 = sphi 0, %s73
      %s75 = sphi 0, %s73
      %s76 = sphi 0, %s75
      %s90 = sphi 0, %s76
      %s94 = sphi 0, %s94
      %s96 = sphi 0, %s94
      %s97 = sphi 0, %s96
      %s111 = sphi 0, %s97
      %s117 = sphi 0, %s119
      %s120 = sphi 0, %s117
      %s121 = sphi 0, %s120
      %s137 = sphi 0, %s121
    $region4: #{tpu_custom_call.1} parent=1 // loop_header_branch
      %21 = sbr.rel (%p19) target = $region8
    $region5: #{tpu_custom_call.1} parent=1 // loop_body
      %s23 = ssub.s32 %s18, 1
      %s24 = ssub.s32 %s18, 2
      %s25 = sadd.s32 %s18, 1
      %s26 = ssub.s32 %s18, %s25
      %p27 = scmp.eq.s32.totalorder %s26, 0
      %s29 = sadd.s32 %s28, 1
      %s30 = scalar_select %p27, %s28, %s29
      %p33 = pneg %p27
      %p34 = scmp.eq.s32.totalorder %s18, 1
      %p35 = por %p33, %p34
      %p36 = scmp.ne.s32.totalorder %s28, %s31
      %p37 = scmp.eq.s32.totalorder %s18, 0
      %p38 = por %p36, %p37
      %p39 = scmp.ne.s32.totalorder %s28, %s31
      %p40 = scmp.eq.s32.totalorder %s23, 1
      %p41 = por %p39, %p40
      %p42 = scmp.ne.s32.totalorder %s31, %s32
      %p43 = scmp.eq.s32.totalorder %s23, 0
      %p44 = por %p42, %p43
      %p45 = scmp.ne.s32.totalorder %s31, %s32
      %p46 = scmp.eq.s32.totalorder %s24, 1
      %p47 = por %p45, %p46
      %p49 = scmp.ne.s32.totalorder %s32, %s48
      %p50 = scmp.eq.s32.totalorder %s24, 0
      %p51 = por %p49, %p50
      %s53 = sadd.s32 %s52, 1
      %p56 = scmp.eq.s32.totalorder %s18, 1
      %p57 = scmp.ne.s32.totalorder %s52, %s54
      %p58 = scmp.eq.s32.totalorder %s18, 0
      %p59 = por %p57, %p58
      %p60 = scmp.ne.s32.totalorder %s52, %s54
      %p61 = scmp.eq.s32.totalorder %s23, 1
      %p62 = por %p60, %p61
      %p63 = scmp.ne.s32.totalorder %s54, %s55
      %p64 = scmp.eq.s32.totalorder %s23, 0
      %p65 = por %p63, %p64
      %p66 = scmp.ne.s32.totalorder %s54, %s55
      %p67 = scmp.eq.s32.totalorder %s24, 1
      %p68 = por %p66, %p67
      %p70 = scmp.ne.s32.totalorder %s55, %s69
      %p71 = scmp.eq.s32.totalorder %s24, 0
      %p72 = por %p70, %p71
      %s74 = sadd.s32 %s73, 1
      %p77 = scmp.eq.s32.totalorder %s18, 1
      %p78 = scmp.ne.s32.totalorder %s73, %s75
      %p79 = scmp.eq.s32.totalorder %s18, 0
      %p80 = por %p78, %p79
      %p81 = scmp.ne.s32.totalorder %s73, %s75
      %p82 = scmp.eq.s32.totalorder %s23, 1
      %p83 = por %p81, %p82
      %p84 = scmp.ne.s32.totalorder %s75, %s76
      %p85 = scmp.eq.s32.totalorder %s23, 0
      %p86 = por %p84, %p85
      %p87 = scmp.ne.s32.totalorder %s75, %s76
      %p88 = scmp.eq.s32.totalorder %s24, 1
      %p89 = por %p87, %p88
      %p91 = scmp.ne.s32.totalorder %s76, %s90
      %p92 = scmp.eq.s32.totalorder %s24, 0
      %p93 = por %p91, %p92
      %s95 = sadd.s32 %s94, 1
      %p98 = scmp.eq.s32.totalorder %s18, 1
      %p99 = scmp.ne.s32.totalorder %s94, %s96
      %p100 = scmp.eq.s32.totalorder %s18, 0
      %p101 = por %p99, %p100
      %p102 = scmp.ne.s32.totalorder %s94, %s96
      %p103 = scmp.eq.s32.totalorder %s23, 1
      %p104 = por %p102, %p103
      %p105 = scmp.ne.s32.totalorder %s96, %s97
      %p106 = scmp.eq.s32.totalorder %s23, 0
      %p107 = por %p105, %p106
      %p108 = scmp.ne.s32.totalorder %s96, %s97
      %p109 = scmp.eq.s32.totalorder %s24, 1
      %p110 = por %p108, %p109
      %p112 = scmp.ne.s32.totalorder %s97, %s111
      %p113 = scmp.eq.s32.totalorder %s24, 0
      %p114 = por %p112, %p113
      %s115 = ssub.s32 %s18, %s25
      %p116 = scmp.eq.s32.totalorder %s115, 0
      %s118 = sadd.s32 %s117, 1
      %s119 = scalar_select %p116, %s117, %s118
      %p122 = pneg %p116
      %p123 = scmp.eq.s32.totalorder %s18, 1
      %p124 = por %p122, %p123
      %p125 = scmp.ne.s32.totalorder %s117, %s120
      %p126 = scmp.eq.s32.totalorder %s18, 0
      %p127 = por %p125, %p126
      %p128 = scmp.ne.s32.totalorder %s117, %s120
      %p129 = scmp.eq.s32.totalorder %s23, 1
      %p130 = por %p128, %p129
      %p131 = scmp.ne.s32.totalorder %s120, %s121
      %p132 = scmp.eq.s32.totalorder %s23, 0
      %p133 = por %p131, %p132
      %p134 = scmp.ne.s32.totalorder %s120, %s121
      %p135 = scmp.eq.s32.totalorder %s24, 1
      %p136 = por %p134, %p135
      %p138 = scmp.ne.s32.totalorder %s121, %s137
      %p139 = scmp.eq.s32.totalorder %s24, 0
      %p140 = por %p138, %p139
      %p141 = scmp.le.s32.totalorder 1, %s18
      %p142 = scmp.lt.s32.totalorder %s18, 3
      %p143 = pnand %p141, %p142
      %p144 = pneg %p143
      // Predicated region
      $region9: #{tpu_custom_call.1} parent=5 // pred_check
        _
      $region10: #{tpu_custom_call.1} parent=5 // pred_check_branch
        %146 = sbr.rel (%p143) target = $region12
      $region11: #{tpu_custom_call.1} parent=5 // pred_region
        %s147 = ssub.s32 %s18, 1
        // Predicated region
        $region13: #{tpu_custom_call.1} parent=11 // pred_check
          %p148 = pneg %p65
        $region14: #{tpu_custom_call.1} parent=11 // pred_check_branch
          %150 = sbr.rel (%p148) target = $region16
        $region15: #{tpu_custom_call.1} parent=11 // pred_region
          %s152 = ssub.s32 768, 768
          %153 = vsyncadd [#allocation6], %s152
          %s154 = sshll.u32 [#allocation5], 4
          %s155 = int_to_ptr.vmem [resolvable:$true] %s154
          %160 = dma.hbm_to_vmem [thread:$0]  %s1, 768, %s155, [#allocation6], 128, 128, 8
        $region16: #{tpu_custom_call.1} parent=11 // pred_fallthru
          _
        // Predicated region
        $region17: #{tpu_custom_call.1} parent=11 // pred_check
          %p161 = pneg %p86
        $region18: #{tpu_custom_call.1} parent=11 // pred_check_branch
          %163 = sbr.rel (%p161) target = $region20
        $region19: #{tpu_custom_call.1} parent=11 // pred_region
          %s165 = ssub.s32 256, 256
          %166 = vsyncadd [#allocation6], %s165
          %s167 = sshll.u32 [#allocation7], 4
          %s168 = int_to_ptr.vmem [resolvable:$true] %s167
          %173 = dma.hbm_to_vmem [thread:$0]  %s2, 256, %s168, [#allocation6], 128, 128, 8
        $region20: #{tpu_custom_call.1} parent=11 // pred_fallthru
          _
        // Predicated region
        $region21: #{tpu_custom_call.1} parent=11 // pred_check
          %p174 = pneg %p107
        $region22: #{tpu_custom_call.1} parent=11 // pred_check_branch
          %176 = sbr.rel (%p174) target = $region24
        $region23: #{tpu_custom_call.1} parent=11 // pred_region
          %s178 = ssub.s32 256, 256
          %179 = vsyncadd [#allocation9], %s178
          %s180 = sshll.u32 [#allocation8], 4
          %s181 = int_to_ptr.vmem [resolvable:$true] %s180
          %186 = dma.hbm_to_vmem [thread:$0]  %s3, 256, %s181, [#allocation9], 128, 128, 8
        $region24: #{tpu_custom_call.1} parent=11 // pred_fallthru
          _
      $region12: #{tpu_custom_call.1} parent=5 // pred_fallthru
        _
      %p187 = scmp.lt.s32.totalorder %s18, 2
      // Predicated region
      $region25: #{tpu_custom_call.1} parent=5 // pred_check
        %p188 = pneg %p187
      $region26: #{tpu_custom_call.1} parent=5 // pred_check_branch
        %190 = sbr.rel (%p188) target = $region28
      $region27: #{tpu_custom_call.1} parent=5 // pred_region
        // Predicated region
        $region29: #{tpu_custom_call.1} parent=27 // pred_check
          %p191 = pneg %p38
        $region30: #{tpu_custom_call.1} parent=27 // pred_check_branch
          %193 = sbr.rel (%p191) target = $region32
        $region31: #{tpu_custom_call.1} parent=27 // pred_region
          %s194 = sand.u32 %s28, 1
          %s195 = scalar_lea.sflag [#allocation3], %s194
          %s196 = sand.u32 %s28, 1
          %s197 = smul.addr %s196, 16
          %s198 = scalar_lea.vmem [#allocation2], %s197
          %s200 = ssub.s32 256, 256
          %201 = vsyncadd %s195, %s200
          %s202 = smul.addr %s18, 2
          %s203 = smul.addr %s202, 128
          %s204 = scalar_lea.hbm %s0, %s203
          %s205 = sshll.u32 %s198, 4
          %s206 = int_to_ptr.vmem [resolvable:$true] %s205
          %211 = dma.hbm_to_vmem [thread:$0]  %s204, 256, %s206, %s195, 128, 128, 8
        $region32: #{tpu_custom_call.1} parent=27 // pred_fallthru
          _
      $region28: #{tpu_custom_call.1} parent=5 // pred_fallthru
        _
      %p212 = scmp.le.s32.totalorder 1, %s18
      %p213 = scmp.lt.s32.totalorder %s18, 3
      %p214 = pnand %p212, %p213
      %p215 = pneg %p214
      // Predicated region
      $region33: #{tpu_custom_call.1} parent=5 // pred_check
        _
      $region34: #{tpu_custom_call.1} parent=5 // pred_check_branch
        %217 = sbr.rel (%p214) target = $region36
      $region35: #{tpu_custom_call.1} parent=5 // pred_region
        %s218 = ssub.s32 %s18, 1
        %s219 = sand.u32 %s31, 1
        %s220 = scalar_lea.sflag [#allocation3], %s219
        %s221 = sand.u32 %s31, 1
        %s222 = smul.addr %s221, 16
        %s223 = scalar_lea.vmem [#allocation2], %s222
        // Predicated region
        $region37: #{tpu_custom_call.1} parent=35 // pred_check
          %p224 = pneg %p44
        $region38: #{tpu_custom_call.1} parent=35 // pred_check_branch
          %226 = sbr.rel (%p224) target = $region40
        $region39: #{tpu_custom_call.1} parent=35 // pred_region
          %227 = dma.done %s220, 256
        $region40: #{tpu_custom_call.1} parent=35 // pred_fallthru
          _
        // Predicated region
        $region41: #{tpu_custom_call.1} parent=35 // pred_check
          %p228 = pneg %p65
        $region42: #{tpu_custom_call.1} parent=35 // pred_check_branch
          %230 = sbr.rel (%p228) target = $region44
        $region43: #{tpu_custom_call.1} parent=35 // pred_region
          %231 = dma.done [#allocation6], 768
        $region44: #{tpu_custom_call.1} parent=35 // pred_fallthru
          _
        // Predicated region
        $region45: #{tpu_custom_call.1} parent=35 // pred_check
          %p232 = pneg %p86
        $region46: #{tpu_custom_call.1} parent=35 // pred_check_branch
          %234 = sbr.rel (%p232) target = $region48
        $region47: #{tpu_custom_call.1} parent=35 // pred_region
          %235 = dma.done [#allocation6], 256
        $region48: #{tpu_custom_call.1} parent=35 // pred_fallthru
          _
        // Predicated region
        $region49: #{tpu_custom_call.1} parent=35 // pred_check
          %p236 = pneg %p107
        $region50: #{tpu_custom_call.1} parent=35 // pred_check_branch
          %238 = sbr.rel (%p236) target = $region52
        $region51: #{tpu_custom_call.1} parent=35 // pred_region
          %239 = dma.done [#allocation9], 256
        $region52: #{tpu_custom_call.1} parent=35 // pred_fallthru
          _
        %s240 = sand.u32 %s31, 1
        %s241 = scalar_lea.sflag [#allocation3], %s240
        %s242 = sand.u32 %s31, 1
        %s243 = smul.addr %s242, 16
        %s244 = scalar_lea.vmem [#allocation2], %s243
        %p245 = pneg %p44
        %p246 = pneg %p41
        %p247 = pneg %p65
        %p248 = pneg %p62
        %p249 = pneg %p86
        %p250 = pneg %p83
        %p251 = pneg %p107
        %p252 = pneg %p104
        %p253 = pneg %p133
        %p254 = pneg %p130
        %s255 = sand.u32 %s120, 1
        %s256 = scalar_lea.sflag [#allocation4], %s255
        %s257 = sand.u32 %s120, 1
        %s258 = smul.addr %s257, 16
        %s259 = scalar_lea.vmem [#allocation10], %s258
        %v260 = vld [vmem:[%s223] sm:$0xff]
        %v261 = vld [vmem:[%s223 + $0x8] sm:$0xff]
        %v262 = vld [vmem:[#allocation5] sm:$0xff]
        %v263 = vld [vmem:[#allocation5 + $0x8] sm:$0xff]
        %v264 = vld [vmem:[#allocation5 + $0x10] sm:$0xff]
        %v265 = vld [vmem:[#allocation5 + $0x18] sm:$0xff]
        %v266 = vld [vmem:[#allocation5 + $0x20] sm:$0xff]
        %v267 = vld [vmem:[#allocation5 + $0x28] sm:$0xff]
        %vm268 = vcmask 130048
        %v270 = vsel %vm268, %v262, 0
        %v273 = vsel %vm268, %v263, 0
        %v276 = vsel %vm268, %v264, 0
        %v279 = vsel %vm268, %v265, 0
        %v282 = vsel %vm268, %v266, 0
        %v285 = vsel %vm268, %v267, 0
        %287 = vmatprep.subr.mxu0 0.0
        %288 = vmatpush1.msra.mxu0 %v260
        %289 = vmatprep.subr.mxu0 0.0
        %290 = vmatpush1.msra.mxu0 %v261
        %291 = vmatprep.subr.mxu0 0.0
        %292 = vmatpush1.msra.mxu0 0.0
        %293 = vmatprep.subr.mxu0 0.0
        %294 = vmatpush1.msra.mxu0 0.0
        %295 = vmatprep.subr.mxu0 0.0
        %296 = vmatpush1.msra.mxu0 0.0
        %297 = vmatprep.subr.mxu0 0.0
        %298 = vmatpush1.msra.mxu0 0.0
        %299 = vmatprep.subr.mxu0 0.0
        %300 = vmatpush1.msra.mxu0 0.0
        %301 = vmatprep.subr.mxu0 0.0
        %302 = vmatpush1.msra.mxu0 0.0
        %303 = vmatprep.subr.mxu0 0.0
        %304 = vmatpush1.msra.mxu0 0.0
        %305 = vmatprep.subr.mxu0 0.0
        %306 = vmatpush1.msra.mxu0 0.0
        %307 = vmatprep.subr.mxu0 0.0
        %308 = vmatpush1.msra.mxu0 0.0
        %309 = vmatprep.subr.mxu0 0.0
        %310 = vmatpush1.msra.mxu0 0.0
        %311 = vmatprep.subr.mxu0 0.0
        %312 = vmatpush1.msra.mxu0 0.0
        %313 = vmatprep.subr.mxu0 0.0
        %314 = vmatpush1.msra.mxu0 0.0
        %315 = vmatprep.subr.mxu0 0.0
        %316 = vmatpush1.msra.mxu0 0.0
        %317 = vmatprep.subr.mxu0 0.0
        %318 = vmatpush1.msra.mxu0 0.0
        %319 = vmatprep.subr.mxu0 0.0
        %320 = vmatpush1.msra.mxu0 0.0
        %321 = vmatprep.subr.mxu0 0.0
        %322 = vmatpush1.msra.mxu0 0.0
        %323 = vmatprep.subr.mxu0 0.0
        %324 = vmatpush1.msra.mxu0 0.0
        %325 = vmatprep.subr.mxu0 0.0
        %326 = vmatpush1.msra.mxu0 0.0
        %327 = vmatprep.subr.mxu0 0.0
        %328 = vmatpush1.msra.mxu0 0.0
        %329 = vmatprep.subr.mxu0 0.0
        %330 = vmatpush1.msra.mxu0 0.0
        %331 = vmatprep.subr.mxu0 0.0
        %332 = vmatpush1.msra.mxu0 0.0
        %333 = vmatprep.subr.mxu0 0.0
        %334 = vmatpush1.msra.mxu0 0.0
        %335 = vmatprep.subr.mxu0 0.0
        %336 = vmatpush1.msra.mxu0 0.0
        %337 = vmatprep.subr.mxu0 0.0
        %338 = vmatpush1.msra.mxu0 0.0
        %339 = vmatprep.subr.mxu0 0.0
        %340 = vmatpush1.msra.mxu0 0.0
        %341 = vmatprep.subr.mxu0 0.0
        %342 = vmatpush1.msra.mxu0 0.0
        %343 = vmatprep.subr.mxu0 0.0
        %344 = vmatpush1.msra.mxu0 0.0
        %345 = vmatprep.subr.mxu0 0.0
        %346 = vmatpush1.msra.mxu0 0.0
        %347 = vmatprep.subr.mxu0 0.0
        %348 = vmatpush1.msra.mxu0 0.0
        %349 = vmatprep.subr.mxu0 0.0
        %350 = vmatpush1.msra.mxu0 0.0
        %351 = vmatprep.mubr.f32.mxu0 0.0
        %352 = vmatmul.mubr.f32.gmra.mrb[0].mxu0 %v270
        %v353 = vpop.f32.mrb[0].mxu0
        %v354 = vadd.f32 0.0, %v353
        %v355 = vpop.f32.mrb[0].mxu0
        %356 = vmatprep.mubr.f32.mxu0 0.0
        %357 = vmatmul.mubr.f32.gmra.mrb[0].mxu0 %v273
        %v358 = vpop.f32.mrb[0].mxu0
        %v359 = vadd.f32 0.0, %v358
        %v360 = vpop.f32.mrb[0].mxu0
        %361 = vmatprep.mubr.f32.mxu0 0.0
        %362 = vmatmul.mubr.f32.gmra.mrb[0].mxu0 %v276
        %v363 = vpop.f32.mrb[0].mxu0
        %v364 = vadd.f32 0.0, %v363
        %v365 = vpop.f32.mrb[0].mxu0
        %366 = vmatprep.mubr.f32.mxu0 0.0
        %367 = vmatmul.mubr.f32.gmra.mrb[0].mxu0 %v279
        %v368 = vpop.f32.mrb[0].mxu0
        %v369 = vadd.f32 0.0, %v368
        %v370 = vpop.f32.mrb[0].mxu0
        %371 = vmatprep.mubr.f32.mxu0 0.0
        %372 = vmatmul.mubr.f32.gmra.mrb[0].mxu0 %v282
        %v373 = vpop.f32.mrb[0].mxu0
        %v374 = vadd.f32 0.0, %v373
        %v375 = vpop.f32.mrb[0].mxu0
        %376 = vmatprep.mubr.f32.mxu0 0.0
        %377 = vmatmul.mubr.f32.gmra.mrb[0].mxu0 %v285
        %v378 = vpop.f32.mrb[0].mxu0
        %v379 = vadd.f32 0.0, %v378
        %v380 = vpop.f32.mrb[0].mxu0
        %381 = vdwg.mxu0
        %v382 = vmul.f32 %v354, 0.35355338
        %v383 = vmul.f32 %v359, 0.35355338
        %384 = vxpose.xlu0.b32.start [1/16] %v382, 128
        %385 = vxpose.xlu0.b32.cont [2/16] 0.0, 128
        %386 = vxpose.xlu0.b32.cont [3/16] 0.0, 128
        %387 = vxpose.xlu0.b32.cont [4/16] 0.0, 128
        %388 = vxpose.xlu0.b32.cont [5/16] 0.0, 128
        %389 = vxpose.xlu0.b32.cont [6/16] 0.0, 128
        %390 = vxpose.xlu0.b32.cont [7/16] 0.0, 128
        %391 = vxpose.xlu0.b32.cont [8/16] 0.0, 128
        %392 = vxpose.xlu0.b32.cont [9/16] 0.0, 128
        %393 = vxpose.xlu0.b32.cont [10/16] 0.0, 128
        %394 = vxpose.xlu0.b32.cont [11/16] 0.0, 128
        %395 = vxpose.xlu0.b32.cont [12/16] 0.0, 128
        %396 = vxpose.xlu0.b32.cont [13/16] 0.0, 128
        %397 = vxpose.xlu0.b32.cont [14/16] 0.0, 128
        %398 = vxpose.xlu0.b32.cont [15/16] 0.0, 128
        %399 = vxpose.xlu0.b32.end [16/16] 0.0, 128
        %v400 = vpop.trf.xlu0
        %v401 = vpop.trf.xlu0
        %v402 = vpop.trf.xlu0
        %v403 = vpop.trf.xlu0
        %v404 = vpop.trf.xlu0
        %v405 = vpop.trf.xlu0
        %v406 = vpop.trf.xlu0
        %v407 = vpop.trf.xlu0
        %v408 = vpop.trf.xlu0
        %v409 = vpop.trf.xlu0
        %v410 = vpop.trf.xlu0
        %v411 = vpop.trf.xlu0
        %v412 = vpop.trf.xlu0
        %v413 = vpop.trf.xlu0
        %v414 = vpop.trf.xlu0
        %v415 = vpop.trf.xlu0
        %vm416 = vcmask 64512
        %v418 = vsel %vm416, %v400, 0
        %v421 = vsel %vm416, %v401, 0
        %v424 = vsel %vm416, %v402, 0
        %v427 = vsel %vm416, %v403, 0
        %v430 = vsel %vm416, %v404, 0
        %v433 = vsel %vm416, %v405, 0
        %v436 = vsel %vm416, %v406, 0
        %v439 = vsel %vm416, %v407, 0
        %441 = vmatprep.subr.mxu0 0.0
        %442 = vmatpush1.msra.mxu0 %v364
        %443 = vmatprep.subr.mxu0 0.0
        %444 = vmatpush1.msra.mxu0 0.0
        %445 = vmatprep.subr.mxu0 0.0
        %446 = vmatpush1.msra.mxu0 0.0
        %447 = vmatprep.subr.mxu0 0.0
        %448 = vmatpush1.msra.mxu0 0.0
        %449 = vmatprep.subr.mxu0 0.0
        %450 = vmatpush1.msra.mxu0 0.0
        %451 = vmatprep.subr.mxu0 0.0
        %452 = vmatpush1.msra.mxu0 0.0
        %453 = vmatprep.subr.mxu0 0.0
        %454 = vmatpush1.msra.mxu0 0.0
        %455 = vmatprep.subr.mxu0 0.0
        %456 = vmatpush1.msra.mxu0 0.0
        %457 = vmatprep.subr.mxu0 0.0
        %458 = vmatpush1.msra.mxu0 0.0
        %459 = vmatprep.subr.mxu0 0.0
        %460 = vmatpush1.msra.mxu0 0.0
        %461 = vmatprep.subr.mxu0 0.0
        %462 = vmatpush1.msra.mxu0 0.0
        %463 = vmatprep.subr.mxu0 0.0
        %464 = vmatpush1.msra.mxu0 0.0
        %465 = vmatprep.subr.mxu0 0.0
        %466 = vmatpush1.msra.mxu0 0.0
        %467 = vmatprep.subr.mxu0 0.0
        %468 = vmatpush1.msra.mxu0 0.0
        %469 = vmatprep.subr.mxu0 0.0
        %470 = vmatpush1.msra.mxu0 0.0
        %471 = vmatprep.subr.mxu0 0.0
        %472 = vmatpush1.msra.mxu0 0.0
        %473 = vmatprep.subr.mxu0 0.0
        %474 = vmatpush1.msra.mxu0 0.0
        %475 = vmatprep.subr.mxu0 0.0
        %476 = vmatpush1.msra.mxu0 0.0
        %477 = vmatprep.subr.mxu0 0.0
        %478 = vmatpush1.msra.mxu0 0.0
        %479 = vmatprep.subr.mxu0 0.0
        %480 = vmatpush1.msra.mxu0 0.0
        %481 = vmatprep.subr.mxu0 0.0
        %482 = vmatpush1.msra.mxu0 0.0
        %483 = vmatprep.subr.mxu0 0.0
        %484 = vmatpush1.msra.mxu0 0.0
        %485 = vmatprep.subr.mxu0 0.0
        %486 = vmatpush1.msra.mxu0 0.0
        %487 = vmatprep.subr.mxu0 0.0
        %488 = vmatpush1.msra.mxu0 0.0
        %489 = vmatprep.subr.mxu0 0.0
        %490 = vmatpush1.msra.mxu0 0.0
        %491 = vmatprep.subr.mxu0 0.0
        %492 = vmatpush1.msra.mxu0 0.0
        %493 = vmatprep.subr.mxu0 0.0
        %494 = vmatpush1.msra.mxu0 0.0
        %495 = vmatprep.subr.mxu0 0.0
        %496 = vmatpush1.msra.mxu0 0.0
        %497 = vmatprep.subr.mxu0 0.0
        %498 = vmatpush1.msra.mxu0 0.0
        %499 = vmatprep.subr.mxu0 0.0
        %500 = vmatpush1.msra.mxu0 0.0
        %501 = vmatprep.subr.mxu0 0.0
        %502 = vmatpush1.msra.mxu0 0.0
        %503 = vmatprep.subr.mxu0 0.0
        %504 = vmatpush1.msra.mxu0 0.0
        %505 = vmatprep.mubr.f32.mxu0 0.0
        %506 = vmatmul.mubr.f32.gmra.mrb[0].mxu0 %v418
        %v507 = vpop.f32.mrb[0].mxu0
        %v508 = vadd.f32 0.0, %v507
        %v509 = vpop.f32.mrb[0].mxu0
        %510 = vmatprep.mubr.f32.mxu0 0.0
        %511 = vmatmul.mubr.f32.gmra.mrb[0].mxu0 %v421
        %v512 = vpop.f32.mrb[0].mxu0
        %v513 = vadd.f32 0.0, %v512
        %v514 = vpop.f32.mrb[0].mxu0
        %515 = vmatprep.mubr.f32.mxu0 0.0
        %516 = vmatmul.mubr.f32.gmra.mrb[0].mxu0 %v424
        %v517 = vpop.f32.mrb[0].mxu0
        %v518 = vadd.f32 0.0, %v517
        %v519 = vpop.f32.mrb[0].mxu0
        %520 = vmatprep.mubr.f32.mxu0 0.0
        %521 = vmatmul.mubr.f32.gmra.mrb[0].mxu0 %v427
        %v522 = vpop.f32.mrb[0].mxu0
        %v523 = vadd.f32 0.0, %v522
        %v524 = vpop.f32.mrb[0].mxu0
        %525 = vmatprep.mubr.f32.mxu0 0.0
        %526 = vmatmul.mubr.f32.gmra.mrb[0].mxu0 %v430
        %v527 = vpop.f32.mrb[0].mxu0
        %v528 = vadd.f32 0.0, %v527
        %v529 = vpop.f32.mrb[0].mxu0
        %530 = vmatprep.mubr.f32.mxu0 0.0
        %531 = vmatmul.mubr.f32.gmra.mrb[0].mxu0 %v433
        %v532 = vpop.f32.mrb[0].mxu0
        %v533 = vadd.f32 0.0, %v532
        %v534 = vpop.f32.mrb[0].mxu0
        %535 = vmatprep.mubr.f32.mxu0 0.0
        %536 = vmatmul.mubr.f32.gmra.mrb[0].mxu0 %v436
        %v537 = vpop.f32.mrb[0].mxu0
        %v538 = vadd.f32 0.0, %v537
        %v539 = vpop.f32.mrb[0].mxu0
        %540 = vmatprep.mubr.f32.mxu0 0.0
        %541 = vmatmul.mubr.f32.gmra.mrb[0].mxu0 %v439
        %v542 = vpop.f32.mrb[0].mxu0
        %v543 = vadd.f32 0.0, %v542
        %v544 = vpop.f32.mrb[0].mxu0
        %545 = vdwg.mxu0
        %546 = vxpose.xlu0.b32.start [1/16] %v383, 128
        %547 = vxpose.xlu0.b32.cont [2/16] 0.0, 128
        %548 = vxpose.xlu0.b32.cont [3/16] 0.0, 128
        %549 = vxpose.xlu0.b32.cont [4/16] 0.0, 128
        %550 = vxpose.xlu0.b32.cont [5/16] 0.0, 128
        %551 = vxpose.xlu0.b32.cont [6/16] 0.0, 128
        %552 = vxpose.xlu0.b32.cont [7/16] 0.0, 128
        %553 = vxpose.xlu0.b32.cont [8/16] 0.0, 128
        %554 = vxpose.xlu0.b32.cont [9/16] 0.0, 128
        %555 = vxpose.xlu0.b32.cont [10/16] 0.0, 128
        %556 = vxpose.xlu0.b32.cont [11/16] 0.0, 128
        %557 = vxpose.xlu0.b32.cont [12/16] 0.0, 128
        %558 = vxpose.xlu0.b32.cont [13/16] 0.0, 128
        %559 = vxpose.xlu0.b32.cont [14/16] 0.0, 128
        %560 = vxpose.xlu0.b32.cont [15/16] 0.0, 128
        %561 = vxpose.xlu0.b32.end [16/16] 0.0, 128
        %v562 = vpop.trf.xlu0
        %v563 = vpop.trf.xlu0
        %v564 = vpop.trf.xlu0
        %v565 = vpop.trf.xlu0
        %v566 = vpop.trf.xlu0
        %v567 = vpop.trf.xlu0
        %v568 = vpop.trf.xlu0
        %v569 = vpop.trf.xlu0
        %v570 = vpop.trf.xlu0
        %v571 = vpop.trf.xlu0
        %v572 = vpop.trf.xlu0
        %v573 = vpop.trf.xlu0
        %v574 = vpop.trf.xlu0
        %v575 = vpop.trf.xlu0
        %v576 = vpop.trf.xlu0
        %v577 = vpop.trf.xlu0
        %v579 = vsel %vm416, %v562, 0
        %v582 = vsel %vm416, %v563, 0
        %v585 = vsel %vm416, %v564, 0
        %v588 = vsel %vm416, %v565, 0
        %v591 = vsel %vm416, %v566, 0
        %v594 = vsel %vm416, %v567, 0
        %v597 = vsel %vm416, %v568, 0
        %v600 = vsel %vm416, %v569, 0
        %602 = vmatprep.subr.mxu0 0.0
        %603 = vmatpush1.msra.mxu0 %v369
        %604 = vmatprep.subr.mxu0 0.0
        %605 = vmatpush1.msra.mxu0 0.0
        %606 = vmatprep.subr.mxu0 0.0
        %607 = vmatpush1.msra.mxu0 0.0
        %608 = vmatprep.subr.mxu0 0.0
        %609 = vmatpush1.msra.mxu0 0.0
        %610 = vmatprep.subr.mxu0 0.0
        %611 = vmatpush1.msra.mxu0 0.0
        %612 = vmatprep.subr.mxu0 0.0
        %613 = vmatpush1.msra.mxu0 0.0
        %614 = vmatprep.subr.mxu0 0.0
        %615 = vmatpush1.msra.mxu0 0.0
        %616 = vmatprep.subr.mxu0 0.0
        %617 = vmatpush1.msra.mxu0 0.0
        %618 = vmatprep.subr.mxu0 0.0
        %619 = vmatpush1.msra.mxu0 0.0
        %620 = vmatprep.subr.mxu0 0.0
        %621 = vmatpush1.msra.mxu0 0.0
        %622 = vmatprep.subr.mxu0 0.0
        %623 = vmatpush1.msra.mxu0 0.0
        %624 = vmatprep.subr.mxu0 0.0
        %625 = vmatpush1.msra.mxu0 0.0
        %626 = vmatprep.subr.mxu0 0.0
        %627 = vmatpush1.msra.mxu0 0.0
        %628 = vmatprep.subr.mxu0 0.0
        %629 = vmatpush1.msra.mxu0 0.0
        %630 = vmatprep.subr.mxu0 0.0
        %631 = vmatpush1.msra.mxu0 0.0
        %632 = vmatprep.subr.mxu0 0.0
        %633 = vmatpush1.msra.mxu0 0.0
        %634 = vmatprep.subr.mxu0 0.0
        %635 = vmatpush1.msra.mxu0 0.0
        %636 = vmatprep.subr.mxu0 0.0
        %637 = vmatpush1.msra.mxu0 0.0
        %638 = vmatprep.subr.mxu0 0.0
        %639 = vmatpush1.msra.mxu0 0.0
        %640 = vmatprep.subr.mxu0 0.0
        %641 = vmatpush1.msra.mxu0 0.0
        %642 = vmatprep.subr.mxu0 0.0
        %643 = vmatpush1.msra.mxu0 0.0
        %644 = vmatprep.subr.mxu0 0.0
        %645 = vmatpush1.msra.mxu0 0.0
        %646 = vmatprep.subr.mxu0 0.0
        %647 = vmatpush1.msra.mxu0 0.0
        %648 = vmatprep.subr.mxu0 0.0
        %649 = vmatpush1.msra.mxu0 0.0
        %650 = vmatprep.subr.mxu0 0.0
        %651 = vmatpush1.msra.mxu0 0.0
        %652 = vmatprep.subr.mxu0 0.0
        %653 = vmatpush1.msra.mxu0 0.0
        %654 = vmatprep.subr.mxu0 0.0
        %655 = vmatpush1.msra.mxu0 0.0
        %656 = vmatprep.subr.mxu0 0.0
        %657 = vmatpush1.msra.mxu0 0.0
        %658 = vmatprep.subr.mxu0 0.0
        %659 = vmatpush1.msra.mxu0 0.0
        %660 = vmatprep.subr.mxu0 0.0
        %661 = vmatpush1.msra.mxu0 0.0
        %662 = vmatprep.subr.mxu0 0.0
        %663 = vmatpush1.msra.mxu0 0.0
        %664 = vmatprep.subr.mxu0 0.0
        %665 = vmatpush1.msra.mxu0 0.0
        %666 = vmatprep.mubr.f32.mxu0 0.0
        %667 = vmatmul.mubr.f32.gmra.mrb[0].mxu0 %v579
        %v668 = vpop.f32.mrb[0].mxu0
        %v669 = vadd.f32 0.0, %v668
        %v670 = vpop.f32.mrb[0].mxu0
        %671 = vmatprep.mubr.f32.mxu0 0.0
        %672 = vmatmul.mubr.f32.gmra.mrb[0].mxu0 %v582
        %v673 = vpop.f32.mrb[0].mxu0
        %v674 = vadd.f32 0.0, %v673
        %v675 = vpop.f32.mrb[0].mxu0
        %676 = vmatprep.mubr.f32.mxu0 0.0
        %677 = vmatmul.mubr.f32.gmra.mrb[0].mxu0 %v585
        %v678 = vpop.f32.mrb[0].mxu0
        %v679 = vadd.f32 0.0, %v678
        %v680 = vpop.f32.mrb[0].mxu0
        %681 = vmatprep.mubr.f32.mxu0 0.0
        %682 = vmatmul.mubr.f32.gmra.mrb[0].mxu0 %v588
        %v683 = vpop.f32.mrb[0].mxu0
        %v684 = vadd.f32 0.0, %v683
        %v685 = vpop.f32.mrb[0].mxu0
        %686 = vmatprep.mubr.f32.mxu0 0.0
        %687 = vmatmul.mubr.f32.gmra.mrb[0].mxu0 %v591
        %v688 = vpop.f32.mrb[0].mxu0
        %v689 = vadd.f32 0.0, %v688
        %v690 = vpop.f32.mrb[0].mxu0
        %691 = vmatprep.mubr.f32.mxu0 0.0
        %692 = vmatmul.mubr.f32.gmra.mrb[0].mxu0 %v594
        %v693 = vpop.f32.mrb[0].mxu0
        %v694 = vadd.f32 0.0, %v693
        %v695 = vpop.f32.mrb[0].mxu0
        %696 = vmatprep.mubr.f32.mxu0 0.0
        %697 = vmatmul.mubr.f32.gmra.mrb[0].mxu0 %v597
        %v698 = vpop.f32.mrb[0].mxu0
        %v699 = vadd.f32 0.0, %v698
        %v700 = vpop.f32.mrb[0].mxu0
        %701 = vmatprep.mubr.f32.mxu0 0.0
        %702 = vmatmul.mubr.f32.gmra.mrb[0].mxu0 %v600
        %v703 = vpop.f32.mrb[0].mxu0
        %v704 = vadd.f32 0.0, %v703
        %v705 = vpop.f32.mrb[0].mxu0
        %706 = vdwg.mxu0
        %vm707 = vcmask 523264
        %v708 = vsel %vm707, %v508, -inf
        %709 = vmax.xlane.f32.xlu0 %v708
        %v710 = vpop.xlane.xlu0 %709
        %v711 = vsel %vm707, %v513, -inf
        %712 = vmax.xlane.f32.xlu0 %v711
        %v713 = vpop.xlane.xlu0 %712
        %v714 = vsel %vm707, %v518, -inf
        %715 = vmax.xlane.f32.xlu0 %v714
        %v716 = vpop.xlane.xlu0 %715
        %v717 = vsel %vm707, %v523, -inf
        %718 = vmax.xlane.f32.xlu0 %v717
        %v719 = vpop.xlane.xlu0 %718
        %v720 = vsel %vm707, %v528, -inf
        %721 = vmax.xlane.f32.xlu0 %v720
        %v722 = vpop.xlane.xlu0 %721
        %v723 = vsel %vm707, %v533, -inf
        %724 = vmax.xlane.f32.xlu0 %v723
        %v725 = vpop.xlane.xlu0 %724
        %v726 = vsel %vm707, %v538, -inf
        %727 = vmax.xlane.f32.xlu0 %v726
        %v728 = vpop.xlane.xlu0 %727
        %v729 = vsel %vm707, %v543, -inf
        %730 = vmax.xlane.f32.xlu0 %v729
        %v731 = vpop.xlane.xlu0 %730
        %v732 = vsel %vm707, %v669, -inf
        %733 = vmax.xlane.f32.xlu0 %v732
        %v734 = vpop.xlane.xlu0 %733
        %v735 = vsel %vm707, %v674, -inf
        %736 = vmax.xlane.f32.xlu0 %v735
        %v737 = vpop.xlane.xlu0 %736
        %v738 = vsel %vm707, %v679, -inf
        %739 = vmax.xlane.f32.xlu0 %v738
        %v740 = vpop.xlane.xlu0 %739
        %v741 = vsel %vm707, %v684, -inf
        %742 = vmax.xlane.f32.xlu0 %v741
        %v743 = vpop.xlane.xlu0 %742
        %v744 = vsel %vm707, %v689, -inf
        %745 = vmax.xlane.f32.xlu0 %v744
        %v746 = vpop.xlane.xlu0 %745
        %v747 = vsel %vm707, %v694, -inf
        %748 = vmax.xlane.f32.xlu0 %v747
        %v749 = vpop.xlane.xlu0 %748
        %v750 = vsel %vm707, %v699, -inf
        %751 = vmax.xlane.f32.xlu0 %v750
        %v752 = vpop.xlane.xlu0 %751
        %v753 = vsel %vm707, %v704, -inf
        %754 = vmax.xlane.f32.xlu0 %v753
        %v755 = vpop.xlane.xlu0 %754
        %v756 = vsub.f32 %v508, %v710
        %v757 = vsub.f32 %v513, %v713
        %v758 = vsub.f32 %v518, %v716
        %v759 = vsub.f32 %v523, %v719
        %v760 = vsub.f32 %v528, %v722
        %v761 = vsub.f32 %v533, %v725
        %v762 = vsub.f32 %v538, %v728
        %v763 = vsub.f32 %v543, %v731
        %v764 = vsub.f32 %v669, %v734
        %v765 = vsub.f32 %v674, %v737
        %v766 = vsub.f32 %v679, %v740
        %v767 = vsub.f32 %v684, %v743
        %v768 = vsub.f32 %v689, %v746
        %v769 = vsub.f32 %v694, %v749
        %v770 = vsub.f32 %v699, %v752
        %v771 = vsub.f32 %v704, %v755
        %v772 = vmul.f32 %v756, 1.442695
        %v773 = vpow.pop %v772
        %v774 = vmul.f32 %v757, 1.442695
        %v775 = vpow.pop %v774
        %v776 = vmul.f32 %v758, 1.442695
        %v777 = vpow.pop %v776
        %v778 = vmul.f32 %v759, 1.442695
        %v779 = vpow.pop %v778
        %v780 = vmul.f32 %v760, 1.442695
        %v781 = vpow.pop %v780
        %v782 = vmul.f32 %v761, 1.442695
        %v783 = vpow.pop %v782
        %v784 = vmul.f32 %v762, 1.442695
        %v785 = vpow.pop %v784
        %v786 = vmul.f32 %v763, 1.442695
        %v787 = vpow.pop %v786
        %v788 = vmul.f32 %v764, 1.442695
        %v789 = vpow.pop %v788
        %v790 = vmul.f32 %v765, 1.442695
        %v791 = vpow.pop %v790
        %v792 = vmul.f32 %v766, 1.442695
        %v793 = vpow.pop %v792
        %v794 = vmul.f32 %v767, 1.442695
        %v795 = vpow.pop %v794
        %v796 = vmul.f32 %v768, 1.442695
        %v797 = vpow.pop %v796
        %v798 = vmul.f32 %v769, 1.442695
        %v799 = vpow.pop %v798
        %v800 = vmul.f32 %v770, 1.442695
        %v801 = vpow.pop %v800
        %v802 = vmul.f32 %v771, 1.442695
        %v803 = vpow.pop %v802
        %v804 = vsel %vm707, %v773, 0.0
        %805 = vadd.xlane.f32.xlu0 %v804
        %v806 = vpop.xlane.xlu0 %805
        %v807 = vsel %vm707, %v775, 0.0
        %808 = vadd.xlane.f32.xlu0 %v807
        %v809 = vpop.xlane.xlu0 %808
        %v810 = vsel %vm707, %v777, 0.0
        %811 = vadd.xlane.f32.xlu0 %v810
        %v812 = vpop.xlane.xlu0 %811
        %v813 = vsel %vm707, %v779, 0.0
        %814 = vadd.xlane.f32.xlu0 %v813
        %v815 = vpop.xlane.xlu0 %814
        %v816 = vsel %vm707, %v781, 0.0
        %817 = vadd.xlane.f32.xlu0 %v816
        %v818 = vpop.xlane.xlu0 %817
        %v819 = vsel %vm707, %v783, 0.0
        %820 = vadd.xlane.f32.xlu0 %v819
        %v821 = vpop.xlane.xlu0 %820
        %v822 = vsel %vm707, %v785, 0.0
        %823 = vadd.xlane.f32.xlu0 %v822
        %v824 = vpop.xlane.xlu0 %823
        %v825 = vsel %vm707, %v787, 0.0
        %826 = vadd.xlane.f32.xlu0 %v825
        %v827 = vpop.xlane.xlu0 %826
        %v828 = vsel %vm707, %v789, 0.0
        %829 = vadd.xlane.f32.xlu0 %v828
        %v830 = vpop.xlane.xlu0 %829
        %v831 = vsel %vm707, %v791, 0.0
        %832 = vadd.xlane.f32.xlu0 %v831
        %v833 = vpop.xlane.xlu0 %832
        %v834 = vsel %vm707, %v793, 0.0
        %835 = vadd.xlane.f32.xlu0 %v834
        %v836 = vpop.xlane.xlu0 %835
        %v837 = vsel %vm707, %v795, 0.0
        %838 = vadd.xlane.f32.xlu0 %v837
        %v839 = vpop.xlane.xlu0 %838
        %v840 = vsel %vm707, %v797, 0.0
        %841 = vadd.xlane.f32.xlu0 %v840
        %v842 = vpop.xlane.xlu0 %841
        %v843 = vsel %vm707, %v799, 0.0
        %844 = vadd.xlane.f32.xlu0 %v843
        %v845 = vpop.xlane.xlu0 %844
        %v846 = vsel %vm707, %v801, 0.0
        %847 = vadd.xlane.f32.xlu0 %v846
        %v848 = vpop.xlane.xlu0 %847
        %v849 = vsel %vm707, %v803, 0.0
        %850 = vadd.xlane.f32.xlu0 %v849
        %v851 = vpop.xlane.xlu0 %850
        %v852 = vrcp.pop %v806
        %v853 = vrcp.pop %v809
        %v854 = vrcp.pop %v812
        %v855 = vrcp.pop %v815
        %v856 = vrcp.pop %v818
        %v857 = vrcp.pop %v821
        %v858 = vrcp.pop %v824
        %v859 = vrcp.pop %v827
        %v860 = vrcp.pop %v830
        %v861 = vrcp.pop %v833
        %v862 = vrcp.pop %v836
        %v863 = vrcp.pop %v839
        %v864 = vrcp.pop %v842
        %v865 = vrcp.pop %v845
        %v866 = vrcp.pop %v848
        %v867 = vrcp.pop %v851
        %v868 = vmul.f32 %v773, %v852
        %v869 = vmul.f32 %v775, %v853
        %v870 = vmul.f32 %v777, %v854
        %v871 = vmul.f32 %v779, %v855
        %v872 = vmul.f32 %v781, %v856
        %v873 = vmul.f32 %v783, %v857
        %v874 = vmul.f32 %v785, %v858
        %v875 = vmul.f32 %v787, %v859
        %v876 = vmul.f32 %v789, %v860
        %v877 = vmul.f32 %v791, %v861
        %v878 = vmul.f32 %v793, %v862
        %v879 = vmul.f32 %v795, %v863
        %v880 = vmul.f32 %v797, %v864
        %v881 = vmul.f32 %v799, %v865
        %v882 = vmul.f32 %v801, %v866
        %v883 = vmul.f32 %v803, %v867
        %v885 = vsel %vm707, %v374, 0
        %v888 = vsel %vm707, %v868, 0
        %v891 = vsel %vm707, %v869, 0
        %v894 = vsel %vm707, %v870, 0
        %v897 = vsel %vm707, %v871, 0
        %v900 = vsel %vm707, %v872, 0
        %v903 = vsel %vm707, %v873, 0
        %v906 = vsel %vm707, %v874, 0
        %v909 = vsel %vm707, %v875, 0
        %911 = vmatprep.subr.mxu0 0.0
        %912 = vmatpush1.xpose.msra.mxu0 %v888
        %913 = vmatprep.subr.mxu0 0.0
        %914 = vmatpush1.xpose.msra.mxu0 %v891
        %915 = vmatprep.subr.mxu0 0.0
        %916 = vmatpush1.xpose.msra.mxu0 %v894
        %917 = vmatprep.subr.mxu0 0.0
        %918 = vmatpush1.xpose.msra.mxu0 %v897
        %919 = vmatprep.subr.mxu0 0.0
        %920 = vmatpush1.xpose.msra.mxu0 %v900
        %921 = vmatprep.subr.mxu0 0.0
        %922 = vmatpush1.xpose.msra.mxu0 %v903
        %923 = vmatprep.subr.mxu0 0.0
        %924 = vmatpush1.xpose.msra.mxu0 %v906
        %925 = vmatprep.subr.mxu0 0.0
        %926 = vmatpush1.xpose.msra.mxu0 %v909
        %927 = vmatprep.subr.mxu0 0.0
        %928 = vmatpush1.xpose.msra.mxu0 0.0
        %929 = vmatprep.subr.mxu0 0.0
        %930 = vmatpush1.xpose.msra.mxu0 0.0
        %931 = vmatprep.subr.mxu0 0.0
        %932 = vmatpush1.xpose.msra.mxu0 0.0
        %933 = vmatprep.subr.mxu0 0.0
        %934 = vmatpush1.xpose.msra.mxu0 0.0
        %935 = vmatprep.subr.mxu0 0.0
        %936 = vmatpush1.xpose.msra.mxu0 0.0
        %937 = vmatprep.subr.mxu0 0.0
        %938 = vmatpush1.xpose.msra.mxu0 0.0
        %939 = vmatprep.subr.mxu0 0.0
        %940 = vmatpush1.xpose.msra.mxu0 0.0
        %941 = vmatprep.subr.mxu0 0.0
        %942 = vmatpush1.xpose.msra.mxu0 0.0
        %943 = vmatprep.subr.mxu0 0.0
        %944 = vmatpush1.xpose.msra.mxu0 0.0
        %945 = vmatprep.subr.mxu0 0.0
        %946 = vmatpush1.xpose.msra.mxu0 0.0
        %947 = vmatprep.subr.mxu0 0.0
        %948 = vmatpush1.xpose.msra.mxu0 0.0
        %949 = vmatprep.subr.mxu0 0.0
        %950 = vmatpush1.xpose.msra.mxu0 0.0
        %951 = vmatprep.subr.mxu0 0.0
        %952 = vmatpush1.xpose.msra.mxu0 0.0
        %953 = vmatprep.subr.mxu0 0.0
        %954 = vmatpush1.xpose.msra.mxu0 0.0
        %955 = vmatprep.subr.mxu0 0.0
        %956 = vmatpush1.xpose.msra.mxu0 0.0
        %957 = vmatprep.subr.mxu0 0.0
        %958 = vmatpush1.xpose.msra.mxu0 0.0
        %959 = vmatprep.subr.mxu0 0.0
        %960 = vmatpush1.xpose.msra.mxu0 0.0
        %961 = vmatprep.subr.mxu0 0.0
        %962 = vmatpush1.xpose.msra.mxu0 0.0
        %963 = vmatprep.subr.mxu0 0.0
        %964 = vmatpush1.xpose.msra.mxu0 0.0
        %965 = vmatprep.subr.mxu0 0.0
        %966 = vmatpush1.xpose.msra.mxu0 0.0
        %967 = vmatprep.subr.mxu0 0.0
        %968 = vmatpush1.xpose.msra.mxu0 0.0
        %969 = vmatprep.subr.mxu0 0.0
        %970 = vmatpush1.xpose.msra.mxu0 0.0
        %971 = vmatprep.subr.mxu0 0.0
        %972 = vmatpush1.xpose.msra.mxu0 0.0
        %973 = vmatprep.subr.mxu0 0.0
        %974 = vmatpush1.xpose.msra.mxu0 0.0
        %975 = vmatprep.mubr.f32.mxu0 0.0
        %976 = vmatmul.mubr.f32.gmra.mrb[0].mxu0 %v885
        %v977 = vpop.f32.mrb[0].mxu0
        %v978 = vadd.f32 0.0, %v977
        %v979 = vpop.f32.mrb[0].mxu0
        %980 = vdwg.mxu0
        %v982 = vsel %vm707, %v379, 0
        %v985 = vsel %vm707, %v876, 0
        %v988 = vsel %vm707, %v877, 0
        %v991 = vsel %vm707, %v878, 0
        %v994 = vsel %vm707, %v879, 0
        %v997 = vsel %vm707, %v880, 0
        %v1000 = vsel %vm707, %v881, 0
        %v1003 = vsel %vm707, %v882, 0
        %v1006 = vsel %vm707, %v883, 0
        %1008 = vmatprep.subr.mxu0 0.0
        %1009 = vmatpush1.xpose.msra.mxu0 %v985
        %1010 = vmatprep.subr.mxu0 0.0
        %1011 = vmatpush1.xpose.msra.mxu0 %v988
        %1012 = vmatprep.subr.mxu0 0.0
        %1013 = vmatpush1.xpose.msra.mxu0 %v991
        %1014 = vmatprep.subr.mxu0 0.0
        %1015 = vmatpush1.xpose.msra.mxu0 %v994
        %1016 = vmatprep.subr.mxu0 0.0
        %1017 = vmatpush1.xpose.msra.mxu0 %v997
        %1018 = vmatprep.subr.mxu0 0.0
        %1019 = vmatpush1.xpose.msra.mxu0 %v1000
        %1020 = vmatprep.subr.mxu0 0.0
        %1021 = vmatpush1.xpose.msra.mxu0 %v1003
        %1022 = vmatprep.subr.mxu0 0.0
        %1023 = vmatpush1.xpose.msra.mxu0 %v1006
        %1024 = vmatprep.subr.mxu0 0.0
        %1025 = vmatpush1.xpose.msra.mxu0 0.0
        %1026 = vmatprep.subr.mxu0 0.0
        %1027 = vmatpush1.xpose.msra.mxu0 0.0
        %1028 = vmatprep.subr.mxu0 0.0
        %1029 = vmatpush1.xpose.msra.mxu0 0.0
        %1030 = vmatprep.subr.mxu0 0.0
        %1031 = vmatpush1.xpose.msra.mxu0 0.0
        %1032 = vmatprep.subr.mxu0 0.0
        %1033 = vmatpush1.xpose.msra.mxu0 0.0
        %1034 = vmatprep.subr.mxu0 0.0
        %1035 = vmatpush1.xpose.msra.mxu0 0.0
        %1036 = vmatprep.subr.mxu0 0.0
        %1037 = vmatpush1.xpose.msra.mxu0 0.0
        %1038 = vmatprep.subr.mxu0 0.0
        %1039 = vmatpush1.xpose.msra.mxu0 0.0
        %1040 = vmatprep.subr.mxu0 0.0
        %1041 = vmatpush1.xpose.msra.mxu0 0.0
        %1042 = vmatprep.subr.mxu0 0.0
        %1043 = vmatpush1.xpose.msra.mxu0 0.0
        %1044 = vmatprep.subr.mxu0 0.0
        %1045 = vmatpush1.xpose.msra.mxu0 0.0
        %1046 = vmatprep.subr.mxu0 0.0
        %1047 = vmatpush1.xpose.msra.mxu0 0.0
        %1048 = vmatprep.subr.mxu0 0.0
        %1049 = vmatpush1.xpose.msra.mxu0 0.0
        %1050 = vmatprep.subr.mxu0 0.0
        %1051 = vmatpush1.xpose.msra.mxu0 0.0
        %1052 = vmatprep.subr.mxu0 0.0
        %1053 = vmatpush1.xpose.msra.mxu0 0.0
        %1054 = vmatprep.subr.mxu0 0.0
        %1055 = vmatpush1.xpose.msra.mxu0 0.0
        %1056 = vmatprep.subr.mxu0 0.0
        %1057 = vmatpush1.xpose.msra.mxu0 0.0
        %1058 = vmatprep.subr.mxu0 0.0
        %1059 = vmatpush1.xpose.msra.mxu0 0.0
        %1060 = vmatprep.subr.mxu0 0.0
        %1061 = vmatpush1.xpose.msra.mxu0 0.0
        %1062 = vmatprep.subr.mxu0 0.0
        %1063 = vmatpush1.xpose.msra.mxu0 0.0
        %1064 = vmatprep.subr.mxu0 0.0
        %1065 = vmatpush1.xpose.msra.mxu0 0.0
        %1066 = vmatprep.subr.mxu0 0.0
        %1067 = vmatpush1.xpose.msra.mxu0 0.0
        %1068 = vmatprep.subr.mxu0 0.0
        %1069 = vmatpush1.xpose.msra.mxu0 0.0
        %1070 = vmatprep.subr.mxu0 0.0
        %1071 = vmatpush1.xpose.msra.mxu0 0.0
        %1072 = vmatprep.mubr.f32.mxu0 0.0
        %1073 = vmatmul.mubr.f32.gmra.mrb[0].mxu0 %v982
        %v1074 = vpop.f32.mrb[0].mxu0
        %v1075 = vadd.f32 0.0, %v1074
        %v1076 = vpop.f32.mrb[0].mxu0
        %1077 = vdwg.mxu0
        %v1078 = vld [vmem:[#allocation7] sm:$0xff]
        %v1079 = vld [vmem:[#allocation7 + $0x8] sm:$0xff]
        %v1080 = vld [vmem:[#allocation8] sm:$0xff]
        %v1081 = vld [vmem:[#allocation8 + $0x8] sm:$0xff]
        %1083 = vset.pattern.permute.xlu0 0
        %1084 = vperm.xlu0 %1083, %v1080
        %v1085 = vpop.permute.xlu0 %1084
        %1088 = vset.pattern.permute.xlu0 0
        %1089 = vperm.xlu0 %1088, %v1081
        %v1090 = vpop.permute.xlu0 %1089
        %v1093 = vsel %vm268, %v1078, 0
        %v1096 = vsel %vm268, %v1079, 0
        %1098 = vmatprep.subr.mxu0 0.0
        %1099 = vmatpush1.msra.mxu0 %v978
        %1100 = vmatprep.subr.mxu0 0.0
        %1101 = vmatpush1.msra.mxu0 %v1075
        %1102 = vmatprep.subr.mxu0 0.0
        %1103 = vmatpush1.msra.mxu0 0.0
        %1104 = vmatprep.subr.mxu0 0.0
        %1105 = vmatpush1.msra.mxu0 0.0
        %1106 = vmatprep.subr.mxu0 0.0
        %1107 = vmatpush1.msra.mxu0 0.0
        %1108 = vmatprep.subr.mxu0 0.0
        %1109 = vmatpush1.msra.mxu0 0.0
        %1110 = vmatprep.subr.mxu0 0.0
        %1111 = vmatpush1.msra.mxu0 0.0
        %1112 = vmatprep.subr.mxu0 0.0
        %1113 = vmatpush1.msra.mxu0 0.0
        %1114 = vmatprep.subr.mxu0 0.0
        %1115 = vmatpush1.msra.mxu0 0.0
        %1116 = vmatprep.subr.mxu0 0.0
        %1117 = vmatpush1.msra.mxu0 0.0
        %1118 = vmatprep.subr.mxu0 0.0
        %1119 = vmatpush1.msra.mxu0 0.0
        %1120 = vmatprep.subr.mxu0 0.0
        %1121 = vmatpush1.msra.mxu0 0.0
        %1122 = vmatprep.subr.mxu0 0.0
        %1123 = vmatpush1.msra.mxu0 0.0
        %1124 = vmatprep.subr.mxu0 0.0
        %1125 = vmatpush1.msra.mxu0 0.0
        %1126 = vmatprep.subr.mxu0 0.0
        %1127 = vmatpush1.msra.mxu0 0.0
        %1128 = vmatprep.subr.mxu0 0.0
        %1129 = vmatpush1.msra.mxu0 0.0
        %1130 = vmatprep.subr.mxu0 0.0
        %1131 = vmatpush1.msra.mxu0 0.0
        %1132 = vmatprep.subr.mxu0 0.0
        %1133 = vmatpush1.msra.mxu0 0.0
        %1134 = vmatprep.subr.mxu0 0.0
        %1135 = vmatpush1.msra.mxu0 0.0
        %1136 = vmatprep.subr.mxu0 0.0
        %1137 = vmatpush1.msra.mxu0 0.0
        %1138 = vmatprep.subr.mxu0 0.0
        %1139 = vmatpush1.msra.mxu0 0.0
        %1140 = vmatprep.subr.mxu0 0.0
        %1141 = vmatpush1.msra.mxu0 0.0
        %1142 = vmatprep.subr.mxu0 0.0
        %1143 = vmatpush1.msra.mxu0 0.0
        %1144 = vmatprep.subr.mxu0 0.0
        %1145 = vmatpush1.msra.mxu0 0.0
        %1146 = vmatprep.subr.mxu0 0.0
        %1147 = vmatpush1.msra.mxu0 0.0
        %1148 = vmatprep.subr.mxu0 0.0
        %1149 = vmatpush1.msra.mxu0 0.0
        %1150 = vmatprep.subr.mxu0 0.0
        %1151 = vmatpush1.msra.mxu0 0.0
        %1152 = vmatprep.subr.mxu0 0.0
        %1153 = vmatpush1.msra.mxu0 0.0
        %1154 = vmatprep.subr.mxu0 0.0
        %1155 = vmatpush1.msra.mxu0 0.0
        %1156 = vmatprep.subr.mxu0 0.0
        %1157 = vmatpush1.msra.mxu0 0.0
        %1158 = vmatprep.subr.mxu0 0.0
        %1159 = vmatpush1.msra.mxu0 0.0
        %1160 = vmatprep.subr.mxu0 0.0
        %1161 = vmatpush1.msra.mxu0 0.0
        %1162 = vmatprep.mubr.f32.mxu0 0.0
        %1163 = vmatmul.mubr.f32.gmra.mrb[0].mxu0 %v1093
        %v1164 = vpop.f32.mrb[0].mxu0
        %v1165 = vadd.f32 %v1085, %v1164
        %v1166 = vpop.f32.mrb[0].mxu0
        %1167 = vmatprep.mubr.f32.mxu0 0.0
        %1168 = vmatmul.mubr.f32.gmra.mrb[0].mxu0 %v1096
        %v1169 = vpop.f32.mrb[0].mxu0
        %v1170 = vadd.f32 %v1090, %v1169
        %v1171 = vpop.f32.mrb[0].mxu0
        %1172 = vdwg.mxu0
        %1173 = vst.msk [vmem:[%s259] sm:$0xff] %vm707, %v1165
        %1174 = vst.msk [vmem:[%s259 + $0x8] sm:$0xff] %vm707, %v1170
        %s1175 = sand.u32 %s120, 1
        %s1176 = scalar_lea.sflag [#allocation4], %s1175
        %s1177 = sand.u32 %s120, 1
        %s1178 = smul.addr %s1177, 16
        %s1179 = scalar_lea.vmem [#allocation10], %s1178
        // Predicated region
        $region53: #{tpu_custom_call.1} parent=35 // pred_check
          %p1180 = pneg %p130
        $region54: #{tpu_custom_call.1} parent=35 // pred_check_branch
          %1182 = sbr.rel (%p1180) target = $region56
        $region55: #{tpu_custom_call.1} parent=35 // pred_region
          %s1184 = ssub.s32 256, 256
          %1185 = vsyncadd %s1176, %s1184
          %s1186 = smul.addr %s23, 2
          %s1187 = smul.addr %s1186, 128
          %s1188 = scalar_lea.hbm %s4, %s1187
          %s1189 = sshll.u32 %s1179, 4
          %s1190 = int_to_ptr.vmem [resolvable:$true] %s1189
          %1195 = dma.vmem_to_hbm [thread:$0]  %s1190, 256, %s1188, %s1176, 128, 128, 8
        $region56: #{tpu_custom_call.1} parent=35 // pred_fallthru
          _
      $region36: #{tpu_custom_call.1} parent=5 // pred_fallthru
        _
      %p1196 = scmp.le.s32.totalorder 2, %s18
      // Predicated region
      $region57: #{tpu_custom_call.1} parent=5 // pred_check
        %p1197 = pneg %p1196
      $region58: #{tpu_custom_call.1} parent=5 // pred_check_branch
        %1199 = sbr.rel (%p1197) target = $region60
      $region59: #{tpu_custom_call.1} parent=5 // pred_region
        %s1200 = ssub.s32 %s18, 2
        // Predicated region
        $region61: #{tpu_custom_call.1} parent=59 // pred_check
          %p1201 = pneg %p136
        $region62: #{tpu_custom_call.1} parent=59 // pred_check_branch
          %1203 = sbr.rel (%p1201) target = $region64
        $region63: #{tpu_custom_call.1} parent=59 // pred_region
          %s1204 = sand.u32 %s121, 1
          %s1205 = scalar_lea.sflag [#allocation4], %s1204
          %s1206 = sand.u32 %s121, 1
          %s1207 = smul.addr %s1206, 16
          %s1208 = scalar_lea.vmem [#allocation10], %s1207
          %1209 = dma.done %s1205, 256
        $region64: #{tpu_custom_call.1} parent=59 // pred_fallthru
          _
      $region60: #{tpu_custom_call.1} parent=5 // pred_fallthru
        _
    $region6: #{tpu_custom_call.1} parent=1 // loop_footer
      %s22 = sadd.s32 1, %s18
    $region7: #{tpu_custom_call.1} parent=1 // loop_footer_branch
      %17 = sbr.rel target = $region3
    $region8: #{tpu_custom_call.1} parent=1 // loop_exit
      _
    %1210 = vsyncpa [#allocation3], 1
    %s1211 = scalar_lea.sflag [#allocation3], 1
    %1212 = vsyncpa %s1211, 1
    %1213 = vsyncpa [#allocation6], 1
    %1214 = vsyncpa [#allocation9], 1
    %1215 = vsyncpa [#allocation4], 1
    %s1216 = scalar_lea.sflag [#allocation4], 1
    %1217 = vsyncpa %s1216, 1

</llo_original>
